<compile_context>
chip_gen: v7x
topology: tpu7x:2x2x1
jax: 0.10.0
libtpu: 0.0.40
codegen_flags: <defaults>
</compile_context>

<pallas_src>
import functools
import math

import jax
import jax.numpy as jnp
from jax.experimental import pallas as pl
from jax.experimental.pallas import tpu as pltpu

_MIB = 1024 * 1024


def _tpu_budget():
    """Returns (target bytes of x per block, scoped-VMEM limit, use approx gate)."""
    vmem_cap = 128 * _MIB
    try:
        info = pltpu.get_tpu_info()
        vmem_cap = int(getattr(info, "vmem_capacity_bytes", vmem_cap)) or vmem_cap
    except Exception:  # not queryable -> conservative defaults
        pass
    if vmem_cap <= 64 * _MIB:
        # v7x-class: only 64 MiB VMEM/TC but 3.2 TB/s HBM -> ~4 MiB blocks amortize
        # the ~0.35us per-step cost; keep scoped budget well under physical VMEM;
        # keep the gate off the full-precision-divide path (thin EUP margin).
        return 4 * _MIB, 44 * _MIB, True
    # v5e / v6e: 128 MiB physical VMEM; raise the scoped limit explicitly
    # (v5e's default is 16 MiB) so 4 MiB blocks double-buffer comfortably.
    return 4 * _MIB, 64 * _MIB, False


def ngram_min_kernel(x_ref, mask_ref, o_ref, *, n_gram, seq_len, fast_gate):
    # x_ref:    (rows, H) slab; blocks cover whole sequences, so row r belongs to
    #           in-sequence position r % seq_len.
    # mask_ref: (rows, 1) 0/1 selection mask (1 = token chosen by rand_index).
    #
    # Compute in f32: matches the PyTorch reference, is the only legal VPU/EUP path
    # on v5e, and keeps the sublane roll on plain f32 instead of packed bf16.
    xf = x_ref[...].astype(jnp.float32)
    mask = mask_ref[...]
    rows = xf.shape[0]

    # In-sequence position of every row of the slab (hoisted out of the g-loop).
    pos = jax.lax.broadcasted_iota(jnp.int32, (rows, 1), 0) % seq_len

    # Running elementwise min over the n_gram shifted copies.  A shift by g is an
    # XLU sublane roll of the whole slab by g rows; zeroing rows with in-sequence
    # position < g reproduces F.pad(...)[:, :-g, :]'s leading zeros AND removes the
    # cross-sequence wrap-around rows introduced by the roll (blocks hold whole
    # sequences only).  The select uses an immediate 0.0 (no zeros slab).
    m = xf
    for g in range(1, n_gram):
        rolled = pltpu.roll(xf, shift=g, axis=0)
        m = jnp.minimum(m, jnp.where(pos < g, 0.0, rolled))

    # index_copy + sigmoid gate, fused:
    #   merged = mask*m + (1-mask)*x ; out = gate*merged + (1-gate)*x
    #   => out = x + gate * mask * (m - x)
    # sigmoid(x) = 1 / (1 + exp(-x)); approx reciprocal (EUP vrcp) on v7x only.
    gate = pl.reciprocal(1.0 + jnp.exp(-xf), approx=fast_gate)
    out = xf + gate * (mask * (m - xf))
    o_ref[...] = out.astype(o_ref.dtype)


def ngram_min_pooling(x, rand_index, n_gram):
    """x: (B, S, H); rand_index: sorted int32 indices into the flattened (B*S) tokens."""
    B, S, H = x.shape
    itemsize = x.dtype.itemsize
    target_block_bytes, vmem_limit, fast_gate = _tpu_budget()

    # ---- tiling --------------------------------------------------------------
    # Blocks are a whole number of sequences (so shifts never need a halo) and the
    # row count is sublane-aligned: 8 rows (f32), 16 (bf16), 32 (int8/fp8).
    sublane = max(8, 32 // max(1, itemsize))
    m_gran = sublane // math.gcd(S, sublane)  # min sequences per block for alignment

    per_seq_bytes = S * H * itemsize
    tb = max(1, target_block_bytes // per_seq_bytes)
    tb = max(m_gran, (tb // m_gran) * m_gran)

    # Keep >=2 grid steps whenever the batch allows it: preserves the DMA/compute
    # pipeline and lets dimension_semantics=("parallel",) shard across v7x's 2 TCs.
    b_aligned = -(-B // m_gran) * m_gran
    if b_aligned >= 2 * m_gran:
        tb = min(tb, max(m_gran, (b_aligned // 2 // m_gran) * m_gran))

    # Shrink until double-buffered in/out blocks + ~5 live f32 temporaries fit the
    # scoped-VMEM budget (never fall back to a single whole-tensor block).
    def fits(tb_):
        rows_ = tb_ * S
        blk_x = rows_ * H * itemsize          # one x (or out) block in HBM dtype
        blk_m = rows_ * 4                     # mask block (f32, width 1)
        tmp32 = rows_ * H * 4                 # one live f32 in-kernel temporary
        return 2 * (2 * blk_x + blk_m) + 5 * tmp32 + 2 * _MIB <= vmem_limit

    while tb > m_gran and not fits(tb):
        tb -= m_gran

    # Prefer a nearby tb that divides B exactly, to avoid dummy-sequence padding.
    low = max(m_gran, (tb // 2 // m_gran) * m_gran)
    for cand in range(tb, low - 1, -m_gran):
        if B % cand == 0:
            tb = cand
            break

    B_pad = -(-B // tb) * tb                  # pad with dummy sequences if needed
    rows = tb * S
    grid = (B_pad // tb,)

    # ---- glue ----------------------------------------------------------------
    # Per-token 0/1 mask from the kept-token index list (XLA scatter, outside the
    # kernel); f32 so the in-kernel blend is a plain multiply chain.
    mask = jnp.zeros((B_pad * S, 1), jnp.float32).at[rand_index, 0].set(1.0)
    x2 = x.reshape(B * S, H)
    if B_pad != B:
        x2 = jnp.pad(x2, ((0, (B_pad - B) * S), (0, 0)))

    kernel = functools.partial(
        ngram_min_kernel, n_gram=n_gram, seq_len=S, fast_gate=fast_gate)
    n_tok = B_pad * S
    cost = pl.CostEstimate(
        flops=(2 * n_gram + 6) * n_tok * H,
        transcendentals=n_tok * H,            # exp in the sigmoid gate
        bytes_accessed=2 * n_tok * H * itemsize + n_tok * 4,
    )

    out2 = pl.pallas_call(
        kernel,
        out_shape=jax.ShapeDtypeStruct((n_tok, H), x.dtype),
        grid_spec=pltpu.PrefetchScalarGridSpec(
            num_scalar_prefetch=0,
            grid=grid,
            in_specs=[
                pl.BlockSpec((rows, H), lambda i: (i, 0)),
                pl.BlockSpec((rows, 1), lambda i: (i, 0)),
            ],
            out_specs=pl.BlockSpec((rows, H), lambda i: (i, 0)),
        ),
        compiler_params=pltpu.CompilerParams(
            dimension_semantics=("parallel",),
            vmem_limit_bytes=vmem_limit,
        ),
        cost_estimate=cost,
    )(x2, mask)
    return out2[: B * S].reshape(B, S, H)


def _reference(x, rand_index, n_gram):
    """Pure-JAX port of the PyTorch forward (eval mode) for verification."""
    B, S, H = x.shape
    copies = [x]
    for g in range(1, n_gram):
        shifted = jnp.concatenate(
            [jnp.zeros((B, g, H), x.dtype), x[:, : S - g, :]], axis=1)
        copies.append(shifted)
    stacked = jnp.stack(copies, axis=0).reshape(n_gram, B * S, H)
    mn = jnp.min(stacked[:, rand_index, :], axis=0)
    merged = x.reshape(B * S, H).at[rand_index].set(mn).reshape(B, S, H)
    gate = jax.nn.sigmoid(x)
    return gate * merged + (1.0 - gate) * x


if __name__ == "__main__":
    key = jax.random.PRNGKey(0)
    kx, kp = jax.random.split(key)

    B, S, H = 2, 8, 32
    n_gram = 3
    phrase_drop = 0.3

    x = jax.random.normal(kx, (B, S, H), dtype=jnp.float32)

    # Deterministic stand-in for np.random.permutation(B*S)[:int(B*S*(1-drop))].sort()
    n_keep = int(B * S * (1.0 - phrase_drop))
    rand_index = jnp.sort(jax.random.permutation(kp, B * S)[:n_keep]).astype(jnp.int32)

    out = ngram_min_pooling(x, rand_index, n_gram)
    jax.block_until_ready(out)
    assert out.shape == (B, S, H)

    ref = _reference(x, rand_index, n_gram)
    # The approx-reciprocal gate (v7x fast path) trades ~1e-3-level accuracy for EUP
    # slots; the exact path matches the f32 reference tightly.
    _, _, _fast = _tpu_budget()
    atol, rtol = (1e-2, 1e-2) if _fast else (1e-4, 1e-4)
    assert jnp.allclose(out, ref, atol=atol, rtol=rtol), "mismatch vs reference"

    print("KERNEL_OK")
</pallas_src>

<mosaic_0001>
module attributes {stable_mosaic.version = 11 : i64} {
  func.func @ngram_min_kernel(%arg0: i32, %arg1: memref<8x32xf32, #tpu.memory_space<vmem>>, %arg2: memref<8x1xf32, #tpu.memory_space<vmem>>, %arg3: memref<8x32xf32, #tpu.memory_space<vmem>>) attributes {dimension_semantics = [#tpu.dimension_semantics<parallel>], iteration_bounds = array<i64: 2>, scalar_prefetch = 0 : i64, scratch_operands = 0 : i64, tpu.core_type = #tpu.core_type<tc>, window_params = [{transform_indices = @transform_0, window_bounds = array<i64: 8, 32>}, {transform_indices = @transform_1, window_bounds = array<i64: 8, 1>}, {transform_indices = @transform_2, window_bounds = array<i64: 8, 32>}]} {
    %c0 = arith.constant 0 : index
    %c0_0 = arith.constant 0 : index
    %0 = vector.load %arg1[%c0, %c0_0] : memref<8x32xf32, #tpu.memory_space<vmem>>, vector<8x32xf32>
    %c0_1 = arith.constant 0 : index
    %c0_2 = arith.constant 0 : index
    %1 = vector.load %arg2[%c0_1, %c0_2] : memref<8x1xf32, #tpu.memory_space<vmem>>, vector<8x1xf32>
    %2 = tpu.iota {dimensions = array<i32: 0>} : vector<8x1xi32>
    %c8_i32 = arith.constant 8 : i32
    %c0_i32 = arith.constant 0 : i32
    %3 = arith.cmpi eq, %c8_i32, %c0_i32 : i32
    %c1_i32 = arith.constant 1 : i32
    %4 = arith.select %3, %c1_i32, %c8_i32 : i32
    %5 = vector.broadcast %4 : i32 to vector<8x1xi32>
    %6 = arith.remsi %2, %5 : vector<8x1xi32>
    %c0_i32_3 = arith.constant 0 : i32
    %7 = vector.broadcast %c0_i32_3 : i32 to vector<8x1xi32>
    %8 = arith.cmpi ne, %6, %7 : vector<8x1xi32>
    %c0_i32_4 = arith.constant 0 : i32
    %9 = vector.broadcast %c0_i32_4 : i32 to vector<8x1xi32>
    %10 = arith.cmpi slt, %6, %9 : vector<8x1xi32>
    %c0_i32_5 = arith.constant 0 : i32
    %11 = arith.cmpi slt, %4, %c0_i32_5 : i32
    %12 = vector.broadcast %11 : i1 to vector<8x1xi1>
    %13 = vector.broadcast %12 : vector<8x1xi1> to vector<8x1xi1>
    %14 = arith.xori %10, %13 : vector<8x1xi1>
    %15 = arith.andi %14, %8 : vector<8x1xi1>
    %16 = vector.broadcast %4 : i32 to vector<8x1xi32>
    %17 = arith.addi %6, %16 : vector<8x1xi32>
    %18 = arith.select %15, %17, %6 : vector<8x1xi1>, vector<8x1xi32>
    %c1_i32_6 = arith.constant 1 : i32
    %19 = tpu.dynamic_rotate %0 by %c1_i32_6 dim 0 : vector<8x32xf32>, i32 -> vector<8x32xf32>
    %c1_i32_7 = arith.constant 1 : i32
    %20 = vector.broadcast %c1_i32_7 : i32 to vector<8x1xi32>
    %21 = arith.cmpi slt, %18, %20 : vector<8x1xi32>
    %cst = arith.constant 0.000000e+00 : f32
    %22 = vector.shape_cast %21 : vector<8x1xi1> to vector<8x1xi1>
    %23 = vector.broadcast %22 : vector<8x1xi1> to vector<8x32xi1>
    %24 = vector.broadcast %cst : f32 to vector<8x32xf32>
    %25 = arith.select %23, %24, %19 : vector<8x32xi1>, vector<8x32xf32>
    %26 = arith.minimumf %0, %25 : vector<8x32xf32>
    %c2_i32 = arith.constant 2 : i32
    %27 = tpu.dynamic_rotate %0 by %c2_i32 dim 0 : vector<8x32xf32>, i32 -> vector<8x32xf32>
    %c2_i32_8 = arith.constant 2 : i32
    %28 = vector.broadcast %c2_i32_8 : i32 to vector<8x1xi32>
    %29 = arith.cmpi slt, %18, %28 : vector<8x1xi32>
    %cst_9 = arith.constant 0.000000e+00 : f32
    %30 = vector.shape_cast %29 : vector<8x1xi1> to vector<8x1xi1>
    %31 = vector.broadcast %30 : vector<8x1xi1> to vector<8x32xi1>
    %32 = vector.broadcast %cst_9 : f32 to vector<8x32xf32>
    %33 = arith.select %31, %32, %27 : vector<8x32xi1>, vector<8x32xf32>
    %34 = arith.minimumf %26, %33 : vector<8x32xf32>
    %cst_10 = arith.constant 0.000000e+00 : f32
    %35 = vector.broadcast %cst_10 : f32 to vector<8x32xf32>
    %36 = arith.subf %35, %0 : vector<8x32xf32>
    %37 = math.exp %36 : vector<8x32xf32>
    %cst_11 = arith.constant 1.000000e+00 : f32
    %38 = vector.broadcast %cst_11 : f32 to vector<8x32xf32>
    %39 = arith.addf %38, %37 : vector<8x32xf32>
    %40 = tpu.reciprocal %39 : vector<8x32xf32> -> vector<8x32xf32>
    %41 = arith.subf %34, %0 : vector<8x32xf32>
    %42 = vector.broadcast %1 : vector<8x1xf32> to vector<8x32xf32>
    %43 = arith.mulf %42, %41 : vector<8x32xf32>
    %44 = arith.mulf %40, %43 : vector<8x32xf32>
    %45 = arith.addf %0, %44 : vector<8x32xf32>
    %c0_12 = arith.constant 0 : index
    %c0_13 = arith.constant 0 : index
    %46 = vector.load %arg3[%c0_12, %c0_13] : memref<8x32xf32, #tpu.memory_space<vmem>>, vector<8x32xf32>
    tpu.vector_store %arg3[%c0_12, %c0_13], %45 {strides = array<i32>} : memref<8x32xf32, #tpu.memory_space<vmem>>, vector<8x32xf32>,
    return
  }
  func.func @transform_0(%arg0: i32) -> (i32, i32) {
    %c0_i32 = arith.constant 0 : i32
    %c0_i32_0 = arith.constant 0 : i32
    return %arg0, %c0_i32 : i32, i32
  }
  func.func @transform_1(%arg0: i32) -> (i32, i32) {
    %c0_i32 = arith.constant 0 : i32
    %c0_i32_0 = arith.constant 0 : i32
    return %arg0, %c0_i32 : i32, i32
  }
  func.func @transform_2(%arg0: i32) -> (i32, i32) {
    %c0_i32 = arith.constant 0 : i32
    %c0_i32_0 = arith.constant 0 : i32
    return %arg0, %c0_i32 : i32, i32
  }
}

</mosaic_0001>

<llo_original>
// kernel: tpu_custom_call.1
$region0: #{tpu_custom_call.1}
  #allocation0 [shape = 'u32[]', space=smem, size = 0x4, offset = 0x4, fixed_abs, tag = 'smem constant byte address 0x4 - core index']
  #allocation1 [shape = 'u32[144,128]{1,0:T(1,128)}', space=vmem, size = 0x12000, scoped, tag = 'internal scratch']
  %s0 = inlined_call_operand.hbm [shape: f32[16,32], index: 0, kind: input, shape index: {}]
  %s1 = inlined_call_operand.hbm [shape: f32[16,1], index: 1, kind: input, shape index: {}]
  %s2 = inlined_call_operand.hbm [shape: f32[16,32], index: 2, kind: output, shape index: {}]
  %s3 = sld [smem:[#allocation0]]
  $region49: #{tpu_custom_call.1} parent=0
    _
  %s5 = ssub.s32 1, %s3
  %s6 = scalar_select 0, %s5, %s3
  $region1: #{tpu_custom_call.1} parent=0
    #allocation2 [shape = 'u8[8192]{0}', space=vmem, size = 0x2000, scoped, tag = 'input window, operand 0']
    #allocation3 [shape = 's32[2]{0}', space=sflag, size = 0x8, scoped, tag = 'scoped memory for tpu_custom_call.1']
    #allocation4 [shape = 's32[2]{0}', space=sflag, size = 0x8, scoped, tag = 'scoped memory for tpu_custom_call.1']
    #allocation5 [shape = 'u8[8192]{0}', space=vmem, size = 0x2000, scoped, tag = 'input window, operand 1']
    #allocation6 [shape = 's32[2]{0}', space=sflag, size = 0x8, scoped, tag = 'scoped memory for tpu_custom_call.1']
    #allocation7 [shape = 'u8[8192]{0}', space=vmem, size = 0x2000, scoped, tag = 'output window, operand 0']
    %7 = vsyncpa [#allocation3], 0
    %s8 = scalar_lea.sflag [#allocation3], 1
    %9 = vsyncpa %s8, 0
    %10 = vsyncpa [#allocation6], 0
    %s11 = scalar_lea.sflag [#allocation6], 1
    %12 = vsyncpa %s11, 0
    %13 = vsyncpa [#allocation4], 0
    %s14 = scalar_lea.sflag [#allocation4], 1
    %15 = vsyncpa %s14, 0
    loop: start=0, step=1, limit=4
    $region2: #{tpu_custom_call.1} parent=1 // loop_pre_header
      _
    $region3: #{tpu_custom_call.1} parent=1 // loop_header
      %s17 = sphi 0, %s21
      %p18 = scmp.ge.s32.totalorder %s17, 4
      %s27 = sphi 0, %s29
      %s30 = sphi 0, %s27
      %s31 = sphi 0, %s30
      %s47 = sphi 0, %s31
      %s53 = sphi 0, %s55
      %s56 = sphi 0, %s53
      %s57 = sphi 0, %s56
      %s73 = sphi 0, %s57
      %s79 = sphi 0, %s81
      %s82 = sphi 0, %s79
      %s83 = sphi 0, %s82
      %s99 = sphi 0, %s83
    $region4: #{tpu_custom_call.1} parent=1 // loop_header_branch
      %20 = sbr.rel (%p18) target = $region8
    $region5: #{tpu_custom_call.1} parent=1 // loop_body
      %s22 = ssub.s32 %s17, 1
      %s23 = ssub.s32 %s17, 2
      %s24 = sadd.s32 %s17, 1
      %s25 = ssub.s32 %s17, %s24
      %p26 = scmp.eq.s32.totalorder %s25, 0
      %s28 = sadd.s32 %s27, 1
      %s29 = scalar_select %p26, %s27, %s28
      %p32 = pneg %p26
      %p33 = scmp.eq.s32.totalorder %s17, 1
      %p34 = por %p32, %p33
      %p35 = scmp.ne.s32.totalorder %s27, %s30
      %p36 = scmp.eq.s32.totalorder %s17, 0
      %p37 = por %p35, %p36
      %p38 = scmp.ne.s32.totalorder %s27, %s30
      %p39 = scmp.eq.s32.totalorder %s22, 1
      %p40 = por %p38, %p39
      %p41 = scmp.ne.s32.totalorder %s30, %s31
      %p42 = scmp.eq.s32.totalorder %s22, 0
      %p43 = por %p41, %p42
      %p44 = scmp.ne.s32.totalorder %s30, %s31
      %p45 = scmp.eq.s32.totalorder %s23, 1
      %p46 = por %p44, %p45
      %p48 = scmp.ne.s32.totalorder %s31, %s47
      %p49 = scmp.eq.s32.totalorder %s23, 0
      %p50 = por %p48, %p49
      %s51 = ssub.s32 %s17, %s24
      %p52 = scmp.eq.s32.totalorder %s51, 0
      %s54 = sadd.s32 %s53, 1
      %s55 = scalar_select %p52, %s53, %s54
      %p58 = pneg %p52
      %p59 = scmp.eq.s32.totalorder %s17, 1
      %p60 = por %p58, %p59
      %p61 = scmp.ne.s32.totalorder %s53, %s56
      %p62 = scmp.eq.s32.totalorder %s17, 0
      %p63 = por %p61, %p62
      %p64 = scmp.ne.s32.totalorder %s53, %s56
      %p65 = scmp.eq.s32.totalorder %s22, 1
      %p66 = por %p64, %p65
      %p67 = scmp.ne.s32.totalorder %s56, %s57
      %p68 = scmp.eq.s32.totalorder %s22, 0
      %p69 = por %p67, %p68
      %p70 = scmp.ne.s32.totalorder %s56, %s57
      %p71 = scmp.eq.s32.totalorder %s23, 1
      %p72 = por %p70, %p71
      %p74 = scmp.ne.s32.totalorder %s57, %s73
      %p75 = scmp.eq.s32.totalorder %s23, 0
      %p76 = por %p74, %p75
      %s77 = ssub.s32 %s17, %s24
      %p78 = scmp.eq.s32.totalorder %s77, 0
      %s80 = sadd.s32 %s79, 1
      %s81 = scalar_select %p78, %s79, %s80
      %p84 = pneg %p78
      %p85 = scmp.eq.s32.totalorder %s17, 1
      %p86 = por %p84, %p85
      %p87 = scmp.ne.s32.totalorder %s79, %s82
      %p88 = scmp.eq.s32.totalorder %s17, 0
      %p89 = por %p87, %p88
      %p90 = scmp.ne.s32.totalorder %s79, %s82
      %p91 = scmp.eq.s32.totalorder %s22, 1
      %p92 = por %p90, %p91
      %p93 = scmp.ne.s32.totalorder %s82, %s83
      %p94 = scmp.eq.s32.totalorder %s22, 0
      %p95 = por %p93, %p94
      %p96 = scmp.ne.s32.totalorder %s82, %s83
      %p97 = scmp.eq.s32.totalorder %s23, 1
      %p98 = por %p96, %p97
      %p100 = scmp.ne.s32.totalorder %s83, %s99
      %p101 = scmp.eq.s32.totalorder %s23, 0
      %p102 = por %p100, %p101
      %p103 = scmp.le.s32.totalorder 1, %s17
      %p104 = scmp.lt.s32.totalorder %s17, 3
      %p105 = pnand %p103, %p104
      %p106 = pneg %p105
      // Predicated region
      $region9: #{tpu_custom_call.1} parent=5 // pred_check
        _
      $region10: #{tpu_custom_call.1} parent=5 // pred_check_branch
        %108 = sbr.rel (%p105) target = $region12
      $region11: #{tpu_custom_call.1} parent=5 // pred_region
        %s109 = ssub.s32 %s17, 1
      $region12: #{tpu_custom_call.1} parent=5 // pred_fallthru
        _
      %p110 = scmp.lt.s32.totalorder %s17, 2
      // Predicated region
      $region13: #{tpu_custom_call.1} parent=5 // pred_check
        %p111 = pneg %p110
      $region14: #{tpu_custom_call.1} parent=5 // pred_check_branch
        %113 = sbr.rel (%p111) target = $region16
      $region15: #{tpu_custom_call.1} parent=5 // pred_region
        // Predicated region
        $region17: #{tpu_custom_call.1} parent=15 // pred_check
          %p114 = pneg %p37
        $region18: #{tpu_custom_call.1} parent=15 // pred_check_branch
          %116 = sbr.rel (%p114) target = $region20
        $region19: #{tpu_custom_call.1} parent=15 // pred_region
          %s117 = sand.u32 %s27, 1
          %s118 = scalar_lea.sflag [#allocation3], %s117
          %s119 = sand.u32 %s27, 1
          %s120 = smul.addr %s119, 8
          %s121 = scalar_lea.vmem [#allocation2], %s120
          %s123 = ssub.s32 128, 128
          %124 = vsyncadd %s118, %s123
          %s125 = smul.addr %s17, 128
          %s126 = scalar_lea.hbm %s0, %s125
          %s128 = sshll.u32 %s121, 4
          %s129 = int_to_ptr.vmem [resolvable:$true] %s128
          %131 = dma.hbm_to_vmem [thread:$0]  %s126, 128, %s129, %s118
        $region20: #{tpu_custom_call.1} parent=15 // pred_fallthru
          _
        // Predicated region
        $region21: #{tpu_custom_call.1} parent=15 // pred_check
          %p132 = pneg %p63
        $region22: #{tpu_custom_call.1} parent=15 // pred_check_branch
          %134 = sbr.rel (%p132) target = $region24
        $region23: #{tpu_custom_call.1} parent=15 // pred_region
          %s135 = sand.u32 %s53, 1
          %s136 = scalar_lea.sflag [#allocation6], %s135
          %s137 = sand.u32 %s53, 1
          %s138 = smul.addr %s137, 8
          %s139 = scalar_lea.vmem [#allocation5], %s138
          %s141 = ssub.s32 128, 128
          %142 = vsyncadd %s136, %s141
          %s143 = smul.addr %s17, 128
          %s144 = scalar_lea.hbm %s1, %s143
          %s146 = sshll.u32 %s139, 4
          %s147 = int_to_ptr.vmem [resolvable:$true] %s146
          %149 = dma.hbm_to_vmem [thread:$0]  %s144, 128, %s147, %s136
        $region24: #{tpu_custom_call.1} parent=15 // pred_fallthru
          _
      $region16: #{tpu_custom_call.1} parent=5 // pred_fallthru
        _
      %p150 = scmp.le.s32.totalorder 1, %s17
      %p151 = scmp.lt.s32.totalorder %s17, 3
      %p152 = pnand %p150, %p151
      %p153 = pneg %p152
      // Predicated region
      $region25: #{tpu_custom_call.1} parent=5 // pred_check
        _
      $region26: #{tpu_custom_call.1} parent=5 // pred_check_branch
        %155 = sbr.rel (%p152) target = $region28
      $region27: #{tpu_custom_call.1} parent=5 // pred_region
        %s156 = ssub.s32 %s17, 1
        %s157 = sand.u32 %s30, 1
        %s158 = scalar_lea.sflag [#allocation3], %s157
        %s159 = sand.u32 %s30, 1
        %s160 = smul.addr %s159, 8
        %s161 = scalar_lea.vmem [#allocation2], %s160
        // Predicated region
        $region29: #{tpu_custom_call.1} parent=27 // pred_check
          %p162 = pneg %p43
        $region30: #{tpu_custom_call.1} parent=27 // pred_check_branch
          %164 = sbr.rel (%p162) target = $region32
        $region31: #{tpu_custom_call.1} parent=27 // pred_region
          %165 = dma.done %s158, 128
        $region32: #{tpu_custom_call.1} parent=27 // pred_fallthru
          _
        %s166 = sand.u32 %s56, 1
        %s167 = scalar_lea.sflag [#allocation6], %s166
        %s168 = sand.u32 %s56, 1
        %s169 = smul.addr %s168, 8
        %s170 = scalar_lea.vmem [#allocation5], %s169
        // Predicated region
        $region33: #{tpu_custom_call.1} parent=27 // pred_check
          %p171 = pneg %p69
        $region34: #{tpu_custom_call.1} parent=27 // pred_check_branch
          %173 = sbr.rel (%p171) target = $region36
        $region35: #{tpu_custom_call.1} parent=27 // pred_region
          %174 = dma.done %s167, 128
        $region36: #{tpu_custom_call.1} parent=27 // pred_fallthru
          _
        %s175 = sand.u32 %s30, 1
        %s176 = scalar_lea.sflag [#allocation3], %s175
        %s177 = sand.u32 %s30, 1
        %s178 = smul.addr %s177, 8
        %s179 = scalar_lea.vmem [#allocation2], %s178
        %p180 = pneg %p43
        %p181 = pneg %p40
        %s182 = sand.u32 %s56, 1
        %s183 = scalar_lea.sflag [#allocation6], %s182
        %s184 = sand.u32 %s56, 1
        %s185 = smul.addr %s184, 8
        %s186 = scalar_lea.vmem [#allocation5], %s185
        %p187 = pneg %p69
        %p188 = pneg %p66
        %p189 = pneg %p95
        %p190 = pneg %p92
        %s191 = sand.u32 %s82, 1
        %s192 = scalar_lea.sflag [#allocation4], %s191
        %s193 = sand.u32 %s82, 1
        %s194 = smul.addr %s193, 8
        %s195 = scalar_lea.vmem [#allocation7], %s194
        %v196 = vld [vmem:[%s161] sm:$0xff]
        %v197 = vld [vmem:[%s170] sm:$0xff]
        %v198 = vlaneseq
        %v199 = vshrl.u32 %v198, 7
        %vm200 = vcmp.lt.s32.totalorder %v199, 0
        %v201 = vsub.s32 0, %v199
        %v202 = vsel %vm200, %v201, %v199
        %v203 = vshrl.u32 %v202, 3
        %v204 = vand.u32 %v202, 7
        %v205 = vsub.s32 0, %v204
        %v206 = vsel %vm200, %v205, %v204
        %vm207 = vcmp.ne.s32.totalorder %v206, 0
        %vm208 = vcmp.lt.s32.totalorder %v206, 0
        %vm209 = vmand %vm208, %vm207
        %v210 = vadd.s32 %v206, 8
        %v211 = vsel %vm209, %v210, %v206
        %v212 = vrot.slane %v196, 7
        %vm213 = vcmp.lt.s32.totalorder %v211, 1
        %v214 = vsel %vm213, 1, 0
        %vm215 = vcmp.eq.s32.totalorder %v214, 1
        %v216 = vsel %vm215, 0.0, %v212
        %v217 = vmin.f32 %v196, %v216
        %v218 = vrot.slane %v196, 6
        %vm219 = vcmp.lt.s32.totalorder %v211, 2
        %v220 = vsel %vm219, 1, 0
        %vm221 = vcmp.eq.s32.totalorder %v220, 1
        %v222 = vsel %vm221, 0.0, %v218
        %v223 = vmin.f32 %v217, %v222
        %v224 = vsub.f32 0.0, %v196
        %v225 = vmul.f32 %v224, 1.442695
        %v226 = vpow.pop %v225
        %v227 = vadd.f32 %v226, 1.0
        %v228 = vrcp.pop %v227
        %v229 = vsub.f32 %v223, %v196
        %231 = vset.pattern.permute.xlu0 0
        %232 = vperm.xlu0 %231, %v197
        %v233 = vpop.permute.xlu0 %232
        %v235 = vmul.f32 %v233, %v229
        %v236 = vmul.f32 %v228, %v235
        %v237 = vadd.f32 %v196, %v236
        %vm238 = vcmask 261120
        %239 = vst.msk [vmem:[%s195] sm:$0xff] %vm238, %v237
        %s240 = sand.u32 %s82, 1
        %s241 = scalar_lea.sflag [#allocation4], %s240
        %s242 = sand.u32 %s82, 1
        %s243 = smul.addr %s242, 8
        %s244 = scalar_lea.vmem [#allocation7], %s243
        // Predicated region
        $region37: #{tpu_custom_call.1} parent=27 // pred_check
          %p245 = pneg %p92
        $region38: #{tpu_custom_call.1} parent=27 // pred_check_branch
          %247 = sbr.rel (%p245) target = $region40
        $region39: #{tpu_custom_call.1} parent=27 // pred_region
          %s249 = ssub.s32 128, 128
          %250 = vsyncadd %s241, %s249
          %s251 = smul.addr %s22, 128
          %s252 = scalar_lea.hbm %s2, %s251
          %s254 = sshll.u32 %s244, 4
          %s255 = int_to_ptr.vmem [resolvable:$true] %s254
          %257 = dma.vmem_to_hbm [thread:$0]  %s255, 128, %s252, %s241
        $region40: #{tpu_custom_call.1} parent=27 // pred_fallthru
          _
      $region28: #{tpu_custom_call.1} parent=5 // pred_fallthru
        _
      %p258 = scmp.le.s32.totalorder 2, %s17
      // Predicated region
      $region41: #{tpu_custom_call.1} parent=5 // pred_check
        %p259 = pneg %p258
      $region42: #{tpu_custom_call.1} parent=5 // pred_check_branch
        %261 = sbr.rel (%p259) target = $region44
      $region43: #{tpu_custom_call.1} parent=5 // pred_region
        %s262 = ssub.s32 %s17, 2
        // Predicated region
        $region45: #{tpu_custom_call.1} parent=43 // pred_check
          %p263 = pneg %p98
        $region46: #{tpu_custom_call.1} parent=43 // pred_check_branch
          %265 = sbr.rel (%p263) target = $region48
        $region47: #{tpu_custom_call.1} parent=43 // pred_region
          %s266 = sand.u32 %s83, 1
          %s267 = scalar_lea.sflag [#allocation4], %s266
          %s268 = sand.u32 %s83, 1
          %s269 = smul.addr %s268, 8
          %s270 = scalar_lea.vmem [#allocation7], %s269
          %271 = dma.done %s267, 128
        $region48: #{tpu_custom_call.1} parent=43 // pred_fallthru
          _
      $region44: #{tpu_custom_call.1} parent=5 // pred_fallthru
        _
    $region6: #{tpu_custom_call.1} parent=1 // loop_footer
      %s21 = sadd.s32 1, %s17
    $region7: #{tpu_custom_call.1} parent=1 // loop_footer_branch
      %16 = sbr.rel target = $region3
    $region8: #{tpu_custom_call.1} parent=1 // loop_exit
      _
    %272 = vsyncpa [#allocation3], 1
    %s273 = scalar_lea.sflag [#allocation3], 1
    %274 = vsyncpa %s273, 1
    %275 = vsyncpa [#allocation6], 1
    %s276 = scalar_lea.sflag [#allocation6], 1
    %277 = vsyncpa %s276, 1
    %278 = vsyncpa [#allocation4], 1
    %s279 = scalar_lea.sflag [#allocation4], 1
    %280 = vsyncpa %s279, 1

</llo_original>
